<compile_context>
chip_gen: v5e
topology: v5e:2x2
jax: 0.10.0
libtpu: 0.0.40
codegen_flags: <defaults>
</compile_context>

<pallas_src>
import jax
import jax.numpy as jnp
from jax.experimental import pallas as pl
from jax.experimental.pallas import tpu as pltpu

IN_FEATURES = 10
HIDDEN = 10
OUT_FEATURES = 5


def toy_mlp_kernel(x_ref, w1_ref, b1_ref, w2_ref, b2_ref, oT_ref):
    # x_ref: (tb, 10) natural-layout tile.  Contract its minor (feature) dim
    # against W1 so the batch tile lands on the 128-lane axis:
    #   h^T(10, tb) = W1 @ x^T ; y^T(5, tb) = W2 @ relu(h^T + b1) + b2
    # The transposed-operand handling runs on MXU-push / XLU slots and
    # overlaps the tile DMA; everything downstream is lane-dense.
    h = jnp.dot(w1_ref[...], x_ref[...].T,
                preferred_element_type=jnp.float32) + b1_ref[...]
    h = jnp.maximum(h, 0.0)                                   # ReLU on the VPU
    y = jnp.dot(w2_ref[...], h,
                preferred_element_type=jnp.float32) + b2_ref[...]
    oT_ref[...] = y.astype(oT_ref.dtype)                      # lane-dense store


def toy_model_forward(x, w1, b1, w2, b2, *, tb=32768):
    """x: (B, 10) f32; w1: (10, 10) (out,in); b1: (10, 1); w2: (5, 10); b2: (5, 1).

    Returns (B, 5) f32 == PyTorch net2(relu(net1(x))).
    """
    B, in_f = x.shape
    hid = w1.shape[0]
    out_f = w2.shape[0]

    # Batch tile: multiple of 128 on the lane axis, clamped so small batches
    # don't blow up the pad.  Big tiles are the main lever for this kernel:
    # the per-step DMA must dwarf the fixed per-grid-step pipeline overhead.
    tb = max(128, (int(tb) // 128) * 128)
    tb = min(tb, pl.cdiv(B, 128) * 128)
    Bp = pl.cdiv(B, tb) * tb
    grid = (Bp // tb,)

    # Pad only when the tile doesn't divide the batch (worst case +127 rows
    # when B is already lane-aligned-ish; no full re-layout pass any more).
    if Bp != B:
        x = jnp.pad(x, ((0, Bp - B), (0, 0)))

    cost = pl.CostEstimate(
        flops=2 * Bp * in_f * hid + 2 * Bp * hid * out_f,
        transcendentals=0,
        bytes_accessed=4 * (Bp * (in_f + out_f)
                            + in_f * hid + hid + hid * out_f + out_f),
    )

    yT = pl.pallas_call(
        toy_mlp_kernel,
        out_shape=jax.ShapeDtypeStruct((out_f, Bp), jnp.float32),
        grid_spec=pltpu.PrefetchScalarGridSpec(
            num_scalar_prefetch=0,
            grid=grid,
            in_specs=[
                # Streamed input tile, natural (batch, feature) layout.
                pl.BlockSpec((tb, in_f), lambda i: (i, 0)),
                # Weights / biases: constant index_maps -> fetched once,
                # resident in VMEM across the whole grid.
                pl.BlockSpec((hid, in_f), lambda i: (0, 0)),
                pl.BlockSpec((hid, 1), lambda i: (0, 0)),
                pl.BlockSpec((out_f, hid), lambda i: (0, 0)),
                pl.BlockSpec((out_f, 1), lambda i: (0, 0)),
            ],
            # Lane-dense output: batch tile on the 128-lane axis.
            out_specs=pl.BlockSpec((out_f, tb), lambda i: (0, i)),
        ),
        compiler_params=pltpu.CompilerParams(
            dimension_semantics=("parallel",),        # independent batch tiles
            vmem_limit_bytes=32 * 1024 * 1024,        # ~8 MiB live at tb=32768
        ),
        cost_estimate=cost,
    )(x, w1, b1, w2, b2)

    # Small (5, Bp) -> (B, 5) fix-up to PyTorch layout (20 B/row, the cheap
    # direction).  Padded columns (>= B) are garbage-by-construction and are
    # sliced off here.
    return yT[:, :B].T


def init_params(key):
    """PyTorch nn.Linear default init U(-1/sqrt(fan_in), +1/sqrt(fan_in)), (out, in) layout."""
    k1, k2, k3, k4 = jax.random.split(key, 4)
    bound = 1.0 / (IN_FEATURES ** 0.5)  # fan_in = 10 for both layers
    w1 = jax.random.uniform(k1, (HIDDEN, IN_FEATURES), jnp.float32, -bound, bound)
    b1 = jax.random.uniform(k2, (HIDDEN, 1), jnp.float32, -bound, bound)
    w2 = jax.random.uniform(k3, (OUT_FEATURES, HIDDEN), jnp.float32, -bound, bound)
    b2 = jax.random.uniform(k4, (OUT_FEATURES, 1), jnp.float32, -bound, bound)
    return w1, b1, w2, b2


if __name__ == "__main__":
    key = jax.random.PRNGKey(0)
    k_x, k_p = jax.random.split(key)

    batch = 8
    x = jax.random.normal(k_x, (batch, IN_FEATURES), jnp.float32)
    w1, b1, w2, b2 = init_params(k_p)

    out = toy_model_forward(x, w1, b1, w2, b2)
    out = jax.block_until_ready(out)

    # Pure-JAX reference of the PyTorch forward: net2(relu(net1(x))).
    ref = jnp.maximum(x @ w1.T + b1[:, 0], 0.0) @ w2.T + b2[:, 0]
    assert out.shape == (batch, OUT_FEATURES)
    assert jnp.allclose(out, ref, atol=1e-5, rtol=1e-5)

    print("KERNEL_OK")
</pallas_src>

<mosaic_0001>
module attributes {stable_mosaic.version = 11 : i64} {
  func.func @toy_mlp_kernel(%arg0: i32, %arg1: memref<128x10xf32, #tpu.memory_space<vmem>>, %arg2: memref<10x10xf32, #tpu.memory_space<vmem>>, %arg3: memref<10x1xf32, #tpu.memory_space<vmem>>, %arg4: memref<5x10xf32, #tpu.memory_space<vmem>>, %arg5: memref<5x1xf32, #tpu.memory_space<vmem>>, %arg6: memref<5x128xf32, #tpu.memory_space<vmem>>) attributes {dimension_semantics = [#tpu.dimension_semantics<parallel>], iteration_bounds = array<i64: 1>, scalar_prefetch = 0 : i64, scratch_operands = 0 : i64, tpu.core_type = #tpu.core_type<tc>, window_params = [{transform_indices = @transform_0, window_bounds = array<i64: 128, 10>}, {pipeline_mode = #tpu.pipeline_mode<synchronous>, transform_indices = @transform_1, window_bounds = array<i64: 10, 10>}, {pipeline_mode = #tpu.pipeline_mode<synchronous>, transform_indices = @transform_2, window_bounds = array<i64: 10, 1>}, {pipeline_mode = #tpu.pipeline_mode<synchronous>, transform_indices = @transform_3, window_bounds = array<i64: 5, 10>}, {pipeline_mode = #tpu.pipeline_mode<synchronous>, transform_indices = @transform_4, window_bounds = array<i64: 5, 1>}, {transform_indices = @transform_5, window_bounds = array<i64: 5, 128>}]} {
    %c0 = arith.constant 0 : index
    %c0_0 = arith.constant 0 : index
    %0 = vector.load %arg2[%c0, %c0_0] : memref<10x10xf32, #tpu.memory_space<vmem>>, vector<10x10xf32>
    %c0_1 = arith.constant 0 : index
    %c0_2 = arith.constant 0 : index
    %1 = vector.load %arg1[%c0_1, %c0_2] : memref<128x10xf32, #tpu.memory_space<vmem>>, vector<128x10xf32>
    %2 = tpu.transpose %1, [1, 0] : vector<128x10xf32> -> vector<10x128xf32>
    %cst = arith.constant dense<0.000000e+00> : vector<10x128xf32>
    %3 = tpu.matmul %0, %2, %cst {dimension_numbers = #tpu.dot_dimension_numbers<[1], [0], [0], [1], [0, 0, 1, 1], [], []>} : vector<10x10xf32>, vector<10x128xf32>, vector<10x128xf32> -> vector<10x128xf32>
    %c0_3 = arith.constant 0 : index
    %c0_4 = arith.constant 0 : index
    %4 = vector.load %arg3[%c0_3, %c0_4] : memref<10x1xf32, #tpu.memory_space<vmem>>, vector<10x1xf32>
    %5 = vector.broadcast %4 : vector<10x1xf32> to vector<10x128xf32>
    %6 = arith.addf %3, %5 : vector<10x128xf32>
    %cst_5 = arith.constant 0.000000e+00 : f32
    %7 = vector.broadcast %cst_5 : f32 to vector<10x128xf32>
    %8 = arith.maximumf %6, %7 : vector<10x128xf32>
    %c0_6 = arith.constant 0 : index
    %c0_7 = arith.constant 0 : index
    %9 = vector.load %arg4[%c0_6, %c0_7] : memref<5x10xf32, #tpu.memory_space<vmem>>, vector<5x10xf32>
    %cst_8 = arith.constant dense<0.000000e+00> : vector<5x128xf32>
    %10 = tpu.matmul %9, %8, %cst_8 {dimension_numbers = #tpu.dot_dimension_numbers<[1], [0], [0], [1], [0, 0, 1, 1], [], []>} : vector<5x10xf32>, vector<10x128xf32>, vector<5x128xf32> -> vector<5x128xf32>
    %c0_9 = arith.constant 0 : index
    %c0_10 = arith.constant 0 : index
    %11 = vector.load %arg5[%c0_9, %c0_10] : memref<5x1xf32, #tpu.memory_space<vmem>>, vector<5x1xf32>
    %12 = vector.broadcast %11 : vector<5x1xf32> to vector<5x128xf32>
    %13 = arith.addf %10, %12 : vector<5x128xf32>
    %c0_11 = arith.constant 0 : index
    %c0_12 = arith.constant 0 : index
    %14 = vector.load %arg6[%c0_11, %c0_12] : memref<5x128xf32, #tpu.memory_space<vmem>>, vector<5x128xf32>
    tpu.vector_store %arg6[%c0_11, %c0_12], %13 {strides = array<i32>} : memref<5x128xf32, #tpu.memory_space<vmem>>, vector<5x128xf32>,
    return
  }
  func.func @transform_0(%arg0: i32) -> (i32, i32) {
    %c0_i32 = arith.constant 0 : i32
    %c0_i32_0 = arith.constant 0 : i32
    return %arg0, %c0_i32 : i32, i32
  }
  func.func @transform_1(%arg0: i32) -> (i32, i32) {
    %c0_i32 = arith.constant 0 : i32
    %c0_i32_0 = arith.constant 0 : i32
    %c0_i32_1 = arith.constant 0 : i32
    return %c0_i32, %c0_i32_0 : i32, i32
  }
  func.func @transform_2(%arg0: i32) -> (i32, i32) {
    %c0_i32 = arith.constant 0 : i32
    %c0_i32_0 = arith.constant 0 : i32
    %c0_i32_1 = arith.constant 0 : i32
    return %c0_i32, %c0_i32_0 : i32, i32
  }
  func.func @transform_3(%arg0: i32) -> (i32, i32) {
    %c0_i32 = arith.constant 0 : i32
    %c0_i32_0 = arith.constant 0 : i32
    %c0_i32_1 = arith.constant 0 : i32
    return %c0_i32, %c0_i32_0 : i32, i32
  }
  func.func @transform_4(%arg0: i32) -> (i32, i32) {
    %c0_i32 = arith.constant 0 : i32
    %c0_i32_0 = arith.constant 0 : i32
    %c0_i32_1 = arith.constant 0 : i32
    return %c0_i32, %c0_i32_0 : i32, i32
  }
  func.func @transform_5(%arg0: i32) -> (i32, i32) {
    %c0_i32 = arith.constant 0 : i32
    %c0_i32_0 = arith.constant 0 : i32
    return %c0_i32, %arg0 : i32, i32
  }
}

</mosaic_0001>

<llo_original>
// kernel: tpu_custom_call.1
$region0: #{tpu_custom_call.1}
  #allocation0 [shape = 'u32[]', space=smem, size = 0x4, offset = 0x4, fixed_abs, tag = 'smem constant byte address 0x4 - core index']
  #allocation1 [shape = 'u32[72,128]{1,0:T(1,128)}', space=vmem, size = 0x9000, scoped, tag = 'internal scratch']
  %s0 = inlined_call_operand.vmem [shape: f32[128,10], index: 0, kind: input, shape index: {}]
  %s1 = inlined_call_operand.vmem [shape: f32[10,10], index: 1, kind: input, shape index: {}]
  %s2 = inlined_call_operand.vmem [shape: f32[10,1], index: 2, kind: input, shape index: {}]
  %s3 = inlined_call_operand.vmem [shape: f32[5,10], index: 3, kind: input, shape index: {}]
  %s4 = inlined_call_operand.vmem [shape: f32[5,1], index: 4, kind: input, shape index: {}]
  %s5 = inlined_call_operand.hbm [shape: f32[5,128], index: 5, kind: output, shape index: {}]
  %s6 = sld [smem:[#allocation0]]
  $region30: #{tpu_custom_call.1} parent=0
    _
  %s8 = ssub.s32 1, %s6
  %s9 = scalar_select 0, %s8, %s6
  $region1: #{tpu_custom_call.1} parent=0
    #allocation2 [shape = 'u8[4096]{0}', space=vmem, size = 0x1000, scoped, tag = 'output window, operand 0, single buffered']
    #allocation3 [shape = 's32[1]{0}', space=sflag, size = 0x4, scoped, tag = 'scoped memory for tpu_custom_call.1']
    %10 = vsyncpa [#allocation3], 0
    // Predicated region
    $region2: #{tpu_custom_call.1} parent=1 // pred_check
      _
    $region3: #{tpu_custom_call.1} parent=1 // pred_check_branch
      %12 = sbr.rel (0) target = $region5
    $region4: #{tpu_custom_call.1} parent=1 // pred_region
      _
    $region5: #{tpu_custom_call.1} parent=1 // pred_fallthru
      _
    // Predicated region
    $region6: #{tpu_custom_call.1} parent=1 // pred_check
      _
    $region7: #{tpu_custom_call.1} parent=1 // pred_check_branch
      %14 = sbr.rel (0) target = $region9
    $region8: #{tpu_custom_call.1} parent=1 // pred_region
      _
    $region9: #{tpu_custom_call.1} parent=1 // pred_fallthru
      _
    // Predicated region
    $region10: #{tpu_custom_call.1} parent=1 // pred_check
      _
    $region11: #{tpu_custom_call.1} parent=1 // pred_check_branch
      %16 = sbr.rel (0) target = $region13
    $region12: #{tpu_custom_call.1} parent=1 // pred_region
      _
    $region13: #{tpu_custom_call.1} parent=1 // pred_fallthru
      _
    // Predicated region
    $region14: #{tpu_custom_call.1} parent=1 // pred_check
      _
    $region15: #{tpu_custom_call.1} parent=1 // pred_check_branch
      %18 = sbr.rel (0) target = $region17
    $region16: #{tpu_custom_call.1} parent=1 // pred_region
      _
    $region17: #{tpu_custom_call.1} parent=1 // pred_fallthru
      _
    // Predicated region
    $region18: #{tpu_custom_call.1} parent=1 // pred_check
      _
    $region19: #{tpu_custom_call.1} parent=1 // pred_check_branch
      %20 = sbr.rel (0) target = $region21
    $region20: #{tpu_custom_call.1} parent=1 // pred_region
      _
    $region21: #{tpu_custom_call.1} parent=1 // pred_fallthru
      _
    %v21 = vld [vmem:[%s1] sm:$0xff]
    %v22 = vld [vmem:[%s1 + $0x8] sm:$0x3]
    %v23 = vld [vmem:[%s0] sm:$0xff]
    %v24 = vld [vmem:[%s0 + $0x8] sm:$0xff]
    %v25 = vld [vmem:[%s0 + $0x10] sm:$0xff]
    %v26 = vld [vmem:[%s0 + $0x18] sm:$0xff]
    %v27 = vld [vmem:[%s0 + $0x20] sm:$0xff]
    %v28 = vld [vmem:[%s0 + $0x28] sm:$0xff]
    %v29 = vld [vmem:[%s0 + $0x30] sm:$0xff]
    %v30 = vld [vmem:[%s0 + $0x38] sm:$0xff]
    %v31 = vld [vmem:[%s0 + $0x40] sm:$0xff]
    %v32 = vld [vmem:[%s0 + $0x48] sm:$0xff]
    %v33 = vld [vmem:[%s0 + $0x50] sm:$0xff]
    %v34 = vld [vmem:[%s0 + $0x58] sm:$0xff]
    %v35 = vld [vmem:[%s0 + $0x60] sm:$0xff]
    %v36 = vld [vmem:[%s0 + $0x68] sm:$0xff]
    %v37 = vld [vmem:[%s0 + $0x70] sm:$0xff]
    %v38 = vld [vmem:[%s0 + $0x78] sm:$0xff]
    %v39 = vld [vmem:[%s2] sm:$0xff]
    %v40 = vld [vmem:[%s2 + $0x8] sm:$0x3]
    %42 = vset.pattern.permute.xlu0 0
    %43 = vperm.xlu0 %42, %v39
    %v44 = vpop.permute.xlu0 %43
    %47 = vset.pattern.permute.xlu0 0
    %48 = vperm.xlu0 %47, %v40
    %v49 = vpop.permute.xlu0 %48
    %vm51 = vcmask 80896
    %v53 = vsel %vm51, %v21, 0
    %v56 = vsel %vm51, %v22, 0
    %v59 = vsel %vm51, %v23, 0
    %v62 = vsel %vm51, %v24, 0
    %v65 = vsel %vm51, %v25, 0
    %v68 = vsel %vm51, %v26, 0
    %v71 = vsel %vm51, %v27, 0
    %v74 = vsel %vm51, %v28, 0
    %v77 = vsel %vm51, %v29, 0
    %v80 = vsel %vm51, %v30, 0
    %v83 = vsel %vm51, %v31, 0
    %v86 = vsel %vm51, %v32, 0
    %v89 = vsel %vm51, %v33, 0
    %v92 = vsel %vm51, %v34, 0
    %v95 = vsel %vm51, %v35, 0
    %v98 = vsel %vm51, %v36, 0
    %v101 = vsel %vm51, %v37, 0
    %v104 = vsel %vm51, %v38, 0
    %106 = vmatpush.xpose.msra.mxu0 %v104
    %107 = vmatpush.xpose.msra.mxu0 %v101
    %108 = vmatpush.xpose.msra.mxu0 %v98
    %109 = vmatpush.xpose.msra.mxu0 %v95
    %110 = vmatpush.xpose.msra.mxu0 %v92
    %111 = vmatpush.xpose.msra.mxu0 %v89
    %112 = vmatpush.xpose.msra.mxu0 %v86
    %113 = vmatpush.xpose.msra.mxu0 %v83
    %114 = vmatpush.xpose.msra.mxu0 %v80
    %115 = vmatpush.xpose.msra.mxu0 %v77
    %116 = vmatpush.xpose.msra.mxu0 %v74
    %117 = vmatpush.xpose.msra.mxu0 %v71
    %118 = vmatpush.xpose.msra.mxu0 %v68
    %119 = vmatpush.xpose.msra.mxu0 %v65
    %120 = vmatpush.xpose.msra.mxu0 %v62
    %121 = vmatpush.xpose.msra.mxu0 %v59
    %122 = vmatmul.f32.gmra.mxu0 %v53
    %v123 = vpop.f32.mrf.mxu0
    %v124 = vadd.f32 %v44, %v123
    %125 = vmatmul.f32.gmra.mxu0 %v56
    %v126 = vpop.f32.mrf.mxu0
    %v127 = vadd.f32 %v49, %v126
    %128 = vdwg.mxu0
    %v129 = vmax.f32 %v124, 0.0
    %v130 = vmax.f32 %v127, 0.0
    %v131 = vld [vmem:[%s3] sm:$0x1f]
    %v132 = vld [vmem:[%s4] sm:$0x1f]
    %134 = vset.pattern.permute.xlu0 0
    %135 = vperm.xlu0 %134, %v132
    %v136 = vpop.permute.xlu0 %135
    %v139 = vsel %vm51, %v131, 0
    %vm141 = vcmask 1041408
    %v143 = vsel %vm141, %v130, 0
    %145 = vmatpush.msra.mxu0 0.0
    %146 = vmatpush.msra.mxu0 0.0
    %147 = vmatpush.msra.mxu0 0.0
    %148 = vmatpush.msra.mxu0 0.0
    %149 = vmatpush.msra.mxu0 0.0
    %150 = vmatpush.msra.mxu0 0.0
    %151 = vmatpush.msra.mxu0 0.0
    %152 = vmatpush.msra.mxu0 0.0
    %153 = vmatpush.msra.mxu0 0.0
    %154 = vmatpush.msra.mxu0 0.0
    %155 = vmatpush.msra.mxu0 0.0
    %156 = vmatpush.msra.mxu0 0.0
    %157 = vmatpush.msra.mxu0 0.0
    %158 = vmatpush.msra.mxu0 0.0
    %159 = vmatpush.msra.mxu0 %v143
    %160 = vmatpush.msra.mxu0 %v129
    %161 = vmatmul.f32.gmra.mxu0 %v139
    %v162 = vpop.f32.mrf.mxu0
    %v163 = vadd.f32 %v136, %v162
    %164 = vdwg.mxu0
    %165 = vst [vmem:[#allocation2] sm:$0x1f] %v163
    // Predicated region
    $region22: #{tpu_custom_call.1} parent=1 // pred_check
      _
    $region23: #{tpu_custom_call.1} parent=1 // pred_check_branch
      %167 = sbr.rel (0) target = $region25
    $region24: #{tpu_custom_call.1} parent=1 // pred_region
      %169 = vsyncadd [#allocation3], 0
      %s171 = sshll.u32 [#allocation2], 4
      %s172 = int_to_ptr.vmem [resolvable:$true] %s171
      %s173 = sshll.u32 %s5, 4
      %s174 = int_to_ptr.hbm [resolvable:$true] %s173
      %176 = dma.vmem_to_hbm [thread:$0]  %s172, 128, %s174, [#allocation3]
    $region25: #{tpu_custom_call.1} parent=1 // pred_fallthru
      _
    // Predicated region
    $region26: #{tpu_custom_call.1} parent=1 // pred_check
      _
    $region27: #{tpu_custom_call.1} parent=1 // pred_check_branch
      %178 = sbr.rel (0) target = $region29
    $region28: #{tpu_custom_call.1} parent=1 // pred_region
      %180 = dma.done [#allocation3], 128
    $region29: #{tpu_custom_call.1} parent=1 // pred_fallthru
      _
    %181 = vsyncpa [#allocation3], 1

</llo_original>
